<compile_context>
chip_gen: v7x
topology: tpu7x:2x2x1
jax: 0.10.0
libtpu: 0.0.40
codegen_flags: <defaults>
</compile_context>

<pallas_src>
import jax
import jax.numpy as jnp
from jax.experimental import pallas as pl
from jax.experimental.pallas import tpu as pltpu


def _gated_block_kernel(
    x_ref,      # (1, C_in, TL)            current L tile of the input (NCL)
    wcol_ref,   # (2*C_inner, K*C_in)      fused sig|gate conv weight, im2col layout
    bsg_ref,    # (2*C_inner, 1)           fused sig|gate bias
    wout_ref,   # (C_in, C_inner)          1x1 output conv weight
    bout_ref,   # (C_in, 1)                1x1 output conv bias
    o_ref,      # (1, C_in, TL)
    halo_ref,   # VMEM (C_in, max(K-1,1))  carry: last K-1 columns of prev tile
):
    c_in = x_ref.shape[1]
    tl = x_ref.shape[2]
    k_taps = wcol_ref.shape[1] // c_in
    c_inner = wcol_ref.shape[0] // 2

    lt = pl.program_id(1)
    x_blk = x_ref[0]                                   # (C_in, TL)

    if k_taps > 1:
        # Zero the causal halo at the start of every sequence (lt == 0 also
        # marks a new batch element, so no stale carry leaks across batches).
        @pl.when(lt == 0)
        def _zero_halo():
            halo_ref[...] = jnp.zeros_like(halo_ref)

        halo = halo_ref[...]                           # (C_in, K-1)
        xwin = jnp.concatenate([halo, x_blk], axis=1)  # (C_in, TL + K - 1)
        # Save this tile's tail for the next L tile (read above already done).
        halo_ref[...] = x_blk[:, tl - (k_taps - 1):]
        # im2col: stack the K shifted windows on the contraction (sublane) dim.
        xcol = jnp.concatenate(
            [xwin[:, k:k + tl] for k in range(k_taps)], axis=0)  # (K*C_in, TL)
    else:
        xcol = x_blk                                   # K == 1: no halo needed

    # One MXU matmul computes both the signal and the gate projections.
    sg = jnp.dot(wcol_ref[...], xcol,
                 preferred_element_type=jnp.float32)   # (2*C_inner, TL)
    sg = sg + bsg_ref[...]                             # (2*C_inner, 1) broadcast

    sig = jax.nn.relu(sg[:c_inner, :])
    gate = jax.nn.sigmoid(sg[c_inner:, :])
    gated = sig * gate                                 # (C_inner, TL)

    out = jnp.dot(wout_ref[...], gated,
                  preferred_element_type=jnp.float32)  # (C_in, TL)
    out = out + bout_ref[...]                          # (C_in, 1) broadcast

    # Residual: the input block itself (no second activation stream).
    o_ref[0] = (x_blk.astype(jnp.float32) + out).astype(o_ref.dtype)


def _pick_tile(seq_len: int, k_taps: int) -> int:
    """Largest lane-dense (multiple of 128) tile dividing L, else the full L."""
    for cand in (1024, 512, 256, 128):
        if seq_len % cand == 0 and cand >= k_taps - 1:
            return cand
    return seq_len


def gated_block(x, w_sig, b_sig, w_gate, b_gate, w_out, b_out):
    """x: (B, C_in, L) float32 (PyTorch NCL). Returns (B, C_in, L)."""
    batch, c_in, seq_len = x.shape
    c_inner, c_in_w, k_taps = w_sig.shape
    assert c_in_w == c_in
    assert w_gate.shape == (c_inner, c_in, k_taps)
    assert k_taps == 1 or seq_len >= k_taps - 1

    # --- weight prep (tiny, one-time) -------------------------------------
    # Fuse sig|gate: (2*C_inner, C_in, K) -> im2col layout (2*C_inner, K*C_in)
    # so that column block k matches tap k of the in-kernel im2col.
    w_fused = jnp.concatenate([w_sig, w_gate], axis=0)
    w_col = jnp.transpose(w_fused, (0, 2, 1)).reshape(2 * c_inner, k_taps * c_in)
    b_sg = jnp.concatenate([b_sig, b_gate], axis=0).reshape(2 * c_inner, 1)
    wout_2d = w_out[:, :, 0]                     # (C_in, C_inner)
    bout_2d = b_out.reshape(c_in, 1)

    # --- tiling ------------------------------------------------------------
    tl = _pick_tile(seq_len, k_taps)
    n_lt = seq_len // tl
    assert n_lt * tl == seq_len
    halo_w = max(k_taps - 1, 1)

    # --- cost hint ----------------------------------------------------------
    itemsize = jnp.dtype(x.dtype).itemsize
    flops = int(2 * batch * seq_len * (2 * c_inner) * (k_taps * c_in)
                + 2 * batch * seq_len * c_in * c_inner)
    transcendentals = int(batch * seq_len * c_inner)           # sigmoid
    bytes_accessed = int(2 * batch * c_in * seq_len * itemsize
                         + (w_col.size + wout_2d.size
                            + b_sg.size + bout_2d.size) * 4)

    out = pl.pallas_call(
        _gated_block_kernel,
        out_shape=jax.ShapeDtypeStruct((batch, c_in, seq_len), x.dtype),
        grid_spec=pltpu.PrefetchScalarGridSpec(
            num_scalar_prefetch=0,
            grid=(batch, n_lt),
            in_specs=[
                pl.BlockSpec((1, c_in, tl), lambda b, l: (b, 0, l)),
                pl.BlockSpec((2 * c_inner, k_taps * c_in), lambda b, l: (0, 0)),
                pl.BlockSpec((2 * c_inner, 1), lambda b, l: (0, 0)),
                pl.BlockSpec((c_in, c_inner), lambda b, l: (0, 0)),
                pl.BlockSpec((c_in, 1), lambda b, l: (0, 0)),
            ],
            out_specs=pl.BlockSpec((1, c_in, tl), lambda b, l: (b, 0, l)),
            scratch_shapes=[pltpu.VMEM((c_in, halo_w), x.dtype)],
        ),
        compiler_params=pltpu.CompilerParams(
            # batch can be megacore-sharded; the L axis must stay sequential
            # because the causal halo is carried tile-to-tile in scratch.
            dimension_semantics=("parallel", "arbitrary")),
        cost_estimate=pl.CostEstimate(
            flops=flops,
            transcendentals=transcendentals,
            bytes_accessed=bytes_accessed),
    )(x, w_col, b_sg, wout_2d, bout_2d)

    return out


def _reference(x, w_sig, b_sig, w_gate, b_gate, w_out, b_out):
    """Pure-JAX reference matching the PyTorch forward."""
    k_taps = w_sig.shape[2]
    xpad = jnp.pad(x, ((0, 0), (0, 0), (k_taps - 1, 0)))  # ConstantPad1d((K-1, 0))
    dn = jax.lax.conv_dimension_numbers(xpad.shape, w_sig.shape, ("NCH", "OIH", "NCH"))
    sig = jax.lax.conv_general_dilated(xpad, w_sig, (1,), "VALID", dimension_numbers=dn)
    sig = sig + b_sig[None, :, None]
    gat = jax.lax.conv_general_dilated(xpad, w_gate, (1,), "VALID", dimension_numbers=dn)
    gat = gat + b_gate[None, :, None]
    hidden = jax.nn.relu(sig) * jax.nn.sigmoid(gat)
    dn2 = jax.lax.conv_dimension_numbers(hidden.shape, w_out.shape, ("NCH", "OIH", "NCH"))
    out = jax.lax.conv_general_dilated(hidden, w_out, (1,), "VALID", dimension_numbers=dn2)
    out = out + b_out[None, :, None]
    return x + out


if __name__ == "__main__":
    # Small shapes consistent with the module: Conv1d over (B, C_in, L).
    batch, c_in, c_inner, k_taps, seq_len = 2, 8, 16, 3, 16

    key = jax.random.PRNGKey(0)
    keys = jax.random.split(key, 8)

    x = jax.random.normal(keys[0], (batch, c_in, seq_len), jnp.float32)

    # Deterministic parameter init (PyTorch-like uniform fan-in scaling).
    def _uinit(k, shape, fan_in):
        bound = 1.0 / jnp.sqrt(fan_in)
        return jax.random.uniform(k, shape, jnp.float32, -bound, bound)

    w_sig = _uinit(keys[1], (c_inner, c_in, k_taps), c_in * k_taps)
    b_sig = _uinit(keys[2], (c_inner,), c_in * k_taps)
    w_gate = _uinit(keys[3], (c_inner, c_in, k_taps), c_in * k_taps)
    b_gate = _uinit(keys[4], (c_inner,), c_in * k_taps)
    w_out = _uinit(keys[5], (c_in, c_inner, 1), c_inner)
    b_out = _uinit(keys[6], (c_in,), c_inner)

    y = gated_block(x, w_sig, b_sig, w_gate, b_gate, w_out, b_out)
    jax.block_until_ready(y)

    y_ref = _reference(x, w_sig, b_sig, w_gate, b_gate, w_out, b_out)
    assert y.shape == x.shape
    assert jnp.allclose(y, y_ref, atol=1e-4, rtol=1e-4), "mismatch vs reference"

    print("KERNEL_OK")
</pallas_src>

<mosaic_0001>
module attributes {stable_mosaic.version = 11 : i64} {
  func.func @_gated_block_kernel(%arg0: i32, %arg1: i32, %arg2: memref<1x8x16xf32, #tpu.memory_space<vmem>>, %arg3: memref<32x24xf32, #tpu.memory_space<vmem>>, %arg4: memref<32x1xf32, #tpu.memory_space<vmem>>, %arg5: memref<8x16xf32, #tpu.memory_space<vmem>>, %arg6: memref<8x1xf32, #tpu.memory_space<vmem>>, %arg7: memref<1x8x16xf32, #tpu.memory_space<vmem>>, %arg8: memref<8x2xf32, #tpu.memory_space<vmem>>) attributes {dimension_semantics = [#tpu.dimension_semantics<parallel>, #tpu.dimension_semantics<arbitrary>], iteration_bounds = array<i64: 2, 1>, scalar_prefetch = 0 : i64, scratch_operands = 1 : i64, tpu.core_type = #tpu.core_type<tc>, window_params = [{transform_indices = @transform_0, window_bounds = array<i64: 1, 8, 16>}, {pipeline_mode = #tpu.pipeline_mode<synchronous>, transform_indices = @transform_1, window_bounds = array<i64: 32, 24>}, {pipeline_mode = #tpu.pipeline_mode<synchronous>, transform_indices = @transform_2, window_bounds = array<i64: 32, 1>}, {pipeline_mode = #tpu.pipeline_mode<synchronous>, transform_indices = @transform_3, window_bounds = array<i64: 8, 16>}, {pipeline_mode = #tpu.pipeline_mode<synchronous>, transform_indices = @transform_4, window_bounds = array<i64: 8, 1>}, {transform_indices = @transform_5, window_bounds = array<i64: 1, 8, 16>}]} {
    %c0 = arith.constant 0 : index
    %c0_0 = arith.constant 0 : index
    %c0_1 = arith.constant 0 : index
    %0 = vector.load %arg2[%c0, %c0_0, %c0_1] : memref<1x8x16xf32, #tpu.memory_space<vmem>>, vector<1x8x16xf32>
    %1 = vector.shape_cast %0 : vector<1x8x16xf32> to vector<8x16xf32>
    %c0_i32 = arith.constant 0 : i32
    %2 = arith.cmpi eq, %arg1, %c0_i32 : i32
    %3 = arith.extui %2 : i1 to i32
    %c0_i32_2 = arith.constant 0 : i32
    %4 = arith.cmpi ne, %3, %c0_i32_2 : i32
    scf.if %4 {
      %cst_21 = arith.constant 0.000000e+00 : f32
      %37 = vector.broadcast %cst_21 : f32 to vector<8x2xf32>
      %c0_22 = arith.constant 0 : index
      %c0_23 = arith.constant 0 : index
      %38 = vector.load %arg8[%c0_22, %c0_23] : memref<8x2xf32, #tpu.memory_space<vmem>>, vector<8x2xf32>
      tpu.vector_store %arg8[%c0_22, %c0_23], %37 {strides = array<i32>} : memref<8x2xf32, #tpu.memory_space<vmem>>, vector<8x2xf32>,
    } else {
    }
    %c0_3 = arith.constant 0 : index
    %c0_4 = arith.constant 0 : index
    %5 = vector.load %arg8[%c0_3, %c0_4] : memref<8x2xf32, #tpu.memory_space<vmem>>, vector<8x2xf32>
    %6 = tpu.concatenate %5, %1 in 1 : vector<8x2xf32>, vector<8x16xf32> -> vector<8x18xf32>
    %7 = vector.extract_strided_slice %1 {offsets = [0, 14], sizes = [8, 2], strides = [1, 1]} : vector<8x16xf32> to vector<8x2xf32>
    %c0_5 = arith.constant 0 : index
    %c0_6 = arith.constant 0 : index
    %8 = vector.load %arg8[%c0_5, %c0_6] : memref<8x2xf32, #tpu.memory_space<vmem>>, vector<8x2xf32>
    tpu.vector_store %arg8[%c0_5, %c0_6], %7 {strides = array<i32>} : memref<8x2xf32, #tpu.memory_space<vmem>>, vector<8x2xf32>,
    %9 = vector.extract_strided_slice %6 {offsets = [0, 0], sizes = [8, 16], strides = [1, 1]} : vector<8x18xf32> to vector<8x16xf32>
    %10 = vector.extract_strided_slice %6 {offsets = [0, 1], sizes = [8, 16], strides = [1, 1]} : vector<8x18xf32> to vector<8x16xf32>
    %11 = vector.extract_strided_slice %6 {offsets = [0, 2], sizes = [8, 16], strides = [1, 1]} : vector<8x18xf32> to vector<8x16xf32>
    %12 = tpu.concatenate %9, %10, %11 in 0 : vector<8x16xf32>, vector<8x16xf32>, vector<8x16xf32> -> vector<24x16xf32>
    %c0_7 = arith.constant 0 : index
    %c0_8 = arith.constant 0 : index
    %13 = vector.load %arg3[%c0_7, %c0_8] : memref<32x24xf32, #tpu.memory_space<vmem>>, vector<32x24xf32>
    %cst = arith.constant dense<0.000000e+00> : vector<32x16xf32>
    %14 = tpu.matmul %13, %12, %cst {dimension_numbers = #tpu.dot_dimension_numbers<[1], [0], [0], [1], [0, 0, 1, 1], [], []>} : vector<32x24xf32>, vector<24x16xf32>, vector<32x16xf32> -> vector<32x16xf32>
    %c0_9 = arith.constant 0 : index
    %c0_10 = arith.constant 0 : index
    %15 = vector.load %arg4[%c0_9, %c0_10] : memref<32x1xf32, #tpu.memory_space<vmem>>, vector<32x1xf32>
    %16 = vector.broadcast %15 : vector<32x1xf32> to vector<32x16xf32>
    %17 = arith.addf %14, %16 : vector<32x16xf32>
    %18 = vector.extract_strided_slice %17 {offsets = [0, 0], sizes = [16, 16], strides = [1, 1]} : vector<32x16xf32> to vector<16x16xf32>
    %cst_11 = arith.constant 0.000000e+00 : f32
    %19 = vector.broadcast %cst_11 : f32 to vector<16x16xf32>
    %20 = arith.maximumf %18, %19 : vector<16x16xf32>
    %21 = vector.extract_strided_slice %17 {offsets = [16, 0], sizes = [16, 16], strides = [1, 1]} : vector<32x16xf32> to vector<16x16xf32>
    %22 = arith.negf %21 : vector<16x16xf32>
    %23 = math.exp %22 : vector<16x16xf32>
    %cst_12 = arith.constant 1.000000e+00 : f32
    %24 = vector.broadcast %cst_12 : f32 to vector<16x16xf32>
    %25 = arith.addf %24, %23 : vector<16x16xf32>
    %26 = arith.divf %24, %25 : vector<16x16xf32>
    %27 = arith.mulf %20, %26 : vector<16x16xf32>
    %c0_13 = arith.constant 0 : index
    %c0_14 = arith.constant 0 : index
    %28 = vector.load %arg5[%c0_13, %c0_14] : memref<8x16xf32, #tpu.memory_space<vmem>>, vector<8x16xf32>
    %cst_15 = arith.constant dense<0.000000e+00> : vector<8x16xf32>
    %29 = tpu.matmul %28, %27, %cst_15 {dimension_numbers = #tpu.dot_dimension_numbers<[1], [0], [0], [1], [0, 0, 1, 1], [], []>} : vector<8x16xf32>, vector<16x16xf32>, vector<8x16xf32> -> vector<8x16xf32>
    %c0_16 = arith.constant 0 : index
    %c0_17 = arith.constant 0 : index
    %30 = vector.load %arg6[%c0_16, %c0_17] : memref<8x1xf32, #tpu.memory_space<vmem>>, vector<8x1xf32>
    %31 = vector.broadcast %30 : vector<8x1xf32> to vector<8x16xf32>
    %32 = arith.addf %29, %31 : vector<8x16xf32>
    %33 = arith.addf %1, %32 : vector<8x16xf32>
    %c0_18 = arith.constant 0 : index
    %c0_19 = arith.constant 0 : index
    %c0_20 = arith.constant 0 : index
    %34 = vector.load %arg7[%c0_18, %c0_19, %c0_20] : memref<1x8x16xf32, #tpu.memory_space<vmem>>, vector<1x8x16xf32>
    %35 = vector.shape_cast %34 : vector<1x8x16xf32> to vector<8x16xf32>
    %36 = vector.shape_cast %33 : vector<8x16xf32> to vector<1x8x16xf32>
    tpu.vector_store %arg7[%c0_18, %c0_19, %c0_20], %36 {strides = array<i32>} : memref<1x8x16xf32, #tpu.memory_space<vmem>>, vector<1x8x16xf32>,
    return
  }
  func.func @transform_0(%arg0: i32, %arg1: i32) -> (i32, i32, i32) {
    %c0_i32 = arith.constant 0 : i32
    %c0_i32_0 = arith.constant 0 : i32
    return %arg0, %c0_i32, %arg1 : i32, i32, i32
  }
  func.func @transform_1(%arg0: i32, %arg1: i32) -> (i32, i32) {
    %c0_i32 = arith.constant 0 : i32
    %c0_i32_0 = arith.constant 0 : i32
    %c0_i32_1 = arith.constant 0 : i32
    return %c0_i32, %c0_i32_0 : i32, i32
  }
  func.func @transform_2(%arg0: i32, %arg1: i32) -> (i32, i32) {
    %c0_i32 = arith.constant 0 : i32
    %c0_i32_0 = arith.constant 0 : i32
    %c0_i32_1 = arith.constant 0 : i32
    return %c0_i32, %c0_i32_0 : i32, i32
  }
  func.func @transform_3(%arg0: i32, %arg1: i32) -> (i32, i32) {
    %c0_i32 = arith.constant 0 : i32
    %c0_i32_0 = arith.constant 0 : i32
    %c0_i32_1 = arith.constant 0 : i32
    return %c0_i32, %c0_i32_0 : i32, i32
  }
  func.func @transform_4(%arg0: i32, %arg1: i32) -> (i32, i32) {
    %c0_i32 = arith.constant 0 : i32
    %c0_i32_0 = arith.constant 0 : i32
    %c0_i32_1 = arith.constant 0 : i32
    return %c0_i32, %c0_i32_0 : i32, i32
  }
  func.func @transform_5(%arg0: i32, %arg1: i32) -> (i32, i32, i32) {
    %c0_i32 = arith.constant 0 : i32
    %c0_i32_0 = arith.constant 0 : i32
    return %arg0, %c0_i32, %arg1 : i32, i32, i32
  }
}

</mosaic_0001>

<llo_original>
// kernel: tpu_custom_call.1
$region0: #{tpu_custom_call.1}
  #allocation0 [shape = 'u32[]', space=smem, size = 0x4, offset = 0x4, fixed_abs, tag = 'smem constant byte address 0x4 - core index']
  #allocation1 [shape = 'u32[144,128]{1,0:T(1,128)}', space=vmem, size = 0x12000, scoped, tag = 'internal scratch']
  #allocation2 [shape = 'f32[8,2]{1,0:T(8,128)}', space=vmem, size = 0x1000, scoped, tag = 'scratch operand']
  %s0 = inlined_call_operand.vmem [shape: f32[2,8,16], index: 0, kind: input, shape index: {}]
  %s1 = inlined_call_operand.vmem [shape: f32[32,24], index: 1, kind: input, shape index: {}]
  %s2 = inlined_call_operand.vmem [shape: f32[32,1], index: 2, kind: input, shape index: {}]
  %s3 = inlined_call_operand.vmem [shape: f32[8,16], index: 3, kind: input, shape index: {}]
  %s4 = inlined_call_operand.vmem [shape: f32[8,1], index: 4, kind: input, shape index: {}]
  %s5 = inlined_call_operand.hbm [shape: f32[2,8,16], index: 5, kind: output, shape index: {}]
  %s6 = sld [smem:[#allocation0]]
  $region57: #{tpu_custom_call.1} parent=0
    _
  %s8 = ssub.s32 1, %s6
  %s9 = scalar_select 0, %s8, %s6
  $region1: #{tpu_custom_call.1} parent=0
    #allocation3 [shape = 'u8[8192]{0}', space=vmem, size = 0x2000, scoped, tag = 'output window, operand 0']
    #allocation4 [shape = 's32[2]{0}', space=sflag, size = 0x8, scoped, tag = 'scoped memory for tpu_custom_call.1']
    %10 = vsyncpa [#allocation4], 0
    %s11 = scalar_lea.sflag [#allocation4], 1
    %12 = vsyncpa %s11, 0
    loop: start=0, step=1, limit=4
    $region2: #{tpu_custom_call.1} parent=1 // loop_pre_header
      _
    $region3: #{tpu_custom_call.1} parent=1 // loop_header
      %s14 = sphi 0, %s18
      %p15 = scmp.ge.s32.totalorder %s14, 4
      %s21 = sphi 0, %s33
      %s22 = sphi 0, %s29
      %s23 = sphi 0, %s21
      %s24 = sphi 0, %s22
      %s25 = sphi 0, %s23
      %s26 = sphi 0, %s24
      %s38 = sphi 0, %s40
      %s41 = sphi 0, %s38
      %s42 = sphi 0, %s41
      %s58 = sphi 0, %s42
      %s62 = sphi 0, %s62
      %s64 = sphi 0, %s62
      %s65 = sphi 0, %s64
      %s79 = sphi 0, %s65
      %s83 = sphi 0, %s83
      %s85 = sphi 0, %s83
      %s86 = sphi 0, %s85
      %s100 = sphi 0, %s86
      %s104 = sphi 0, %s104
      %s106 = sphi 0, %s104
      %s107 = sphi 0, %s106
      %s121 = sphi 0, %s107
      %s125 = sphi 0, %s125
      %s127 = sphi 0, %s125
      %s128 = sphi 0, %s127
      %s142 = sphi 0, %s128
      %s150 = sphi 0, %s152
      %s153 = sphi 0, %s150
      %s154 = sphi 0, %s153
      %s170 = sphi 0, %s154
    $region4: #{tpu_custom_call.1} parent=1 // loop_header_branch
      %17 = sbr.rel (%p15) target = $region8
    $region5: #{tpu_custom_call.1} parent=1 // loop_body
      %s19 = ssub.s32 %s14, 1
      %s20 = ssub.s32 %s14, 2
      %s27 = sadd.s32 1, %s22
      %p28 = scmp.ge.s32.totalorder %s27, 1
      %s29 = scalar_select %p28, 0, %s27
      %s30 = sadd.s32 1, %s21
      %s31 = scalar_select %p28, %s30, %s21
      %p32 = scmp.ge.s32.totalorder %s31, 2
      %s33 = scalar_select %p32, 0, %s31
      %s34 = ssub.s32 %s21, %s33
      %s35 = ssub.s32 %s22, %s29
      %s36 = sor.u32 %s34, %s35
      %p37 = scmp.eq.s32.totalorder %s36, 0
      %s39 = sadd.s32 %s38, 1
      %s40 = scalar_select %p37, %s38, %s39
      %p43 = pneg %p37
      %p44 = scmp.eq.s32.totalorder %s14, 1
      %p45 = por %p43, %p44
      %p46 = scmp.ne.s32.totalorder %s38, %s41
      %p47 = scmp.eq.s32.totalorder %s14, 0
      %p48 = por %p46, %p47
      %p49 = scmp.ne.s32.totalorder %s38, %s41
      %p50 = scmp.eq.s32.totalorder %s19, 1
      %p51 = por %p49, %p50
      %p52 = scmp.ne.s32.totalorder %s41, %s42
      %p53 = scmp.eq.s32.totalorder %s19, 0
      %p54 = por %p52, %p53
      %p55 = scmp.ne.s32.totalorder %s41, %s42
      %p56 = scmp.eq.s32.totalorder %s20, 1
      %p57 = por %p55, %p56
      %p59 = scmp.ne.s32.totalorder %s42, %s58
      %p60 = scmp.eq.s32.totalorder %s20, 0
      %p61 = por %p59, %p60
      %s63 = sadd.s32 %s62, 1
      %p66 = scmp.eq.s32.totalorder %s14, 1
      %p67 = scmp.ne.s32.totalorder %s62, %s64
      %p68 = scmp.eq.s32.totalorder %s14, 0
      %p69 = por %p67, %p68
      %p70 = scmp.ne.s32.totalorder %s62, %s64
      %p71 = scmp.eq.s32.totalorder %s19, 1
      %p72 = por %p70, %p71
      %p73 = scmp.ne.s32.totalorder %s64, %s65
      %p74 = scmp.eq.s32.totalorder %s19, 0
      %p75 = por %p73, %p74
      %p76 = scmp.ne.s32.totalorder %s64, %s65
      %p77 = scmp.eq.s32.totalorder %s20, 1
      %p78 = por %p76, %p77
      %p80 = scmp.ne.s32.totalorder %s65, %s79
      %p81 = scmp.eq.s32.totalorder %s20, 0
      %p82 = por %p80, %p81
      %s84 = sadd.s32 %s83, 1
      %p87 = scmp.eq.s32.totalorder %s14, 1
      %p88 = scmp.ne.s32.totalorder %s83, %s85
      %p89 = scmp.eq.s32.totalorder %s14, 0
      %p90 = por %p88, %p89
      %p91 = scmp.ne.s32.totalorder %s83, %s85
      %p92 = scmp.eq.s32.totalorder %s19, 1
      %p93 = por %p91, %p92
      %p94 = scmp.ne.s32.totalorder %s85, %s86
      %p95 = scmp.eq.s32.totalorder %s19, 0
      %p96 = por %p94, %p95
      %p97 = scmp.ne.s32.totalorder %s85, %s86
      %p98 = scmp.eq.s32.totalorder %s20, 1
      %p99 = por %p97, %p98
      %p101 = scmp.ne.s32.totalorder %s86, %s100
      %p102 = scmp.eq.s32.totalorder %s20, 0
      %p103 = por %p101, %p102
      %s105 = sadd.s32 %s104, 1
      %p108 = scmp.eq.s32.totalorder %s14, 1
      %p109 = scmp.ne.s32.totalorder %s104, %s106
      %p110 = scmp.eq.s32.totalorder %s14, 0
      %p111 = por %p109, %p110
      %p112 = scmp.ne.s32.totalorder %s104, %s106
      %p113 = scmp.eq.s32.totalorder %s19, 1
      %p114 = por %p112, %p113
      %p115 = scmp.ne.s32.totalorder %s106, %s107
      %p116 = scmp.eq.s32.totalorder %s19, 0
      %p117 = por %p115, %p116
      %p118 = scmp.ne.s32.totalorder %s106, %s107
      %p119 = scmp.eq.s32.totalorder %s20, 1
      %p120 = por %p118, %p119
      %p122 = scmp.ne.s32.totalorder %s107, %s121
      %p123 = scmp.eq.s32.totalorder %s20, 0
      %p124 = por %p122, %p123
      %s126 = sadd.s32 %s125, 1
      %p129 = scmp.eq.s32.totalorder %s14, 1
      %p130 = scmp.ne.s32.totalorder %s125, %s127
      %p131 = scmp.eq.s32.totalorder %s14, 0
      %p132 = por %p130, %p131
      %p133 = scmp.ne.s32.totalorder %s125, %s127
      %p134 = scmp.eq.s32.totalorder %s19, 1
      %p135 = por %p133, %p134
      %p136 = scmp.ne.s32.totalorder %s127, %s128
      %p137 = scmp.eq.s32.totalorder %s19, 0
      %p138 = por %p136, %p137
      %p139 = scmp.ne.s32.totalorder %s127, %s128
      %p140 = scmp.eq.s32.totalorder %s20, 1
      %p141 = por %p139, %p140
      %p143 = scmp.ne.s32.totalorder %s128, %s142
      %p144 = scmp.eq.s32.totalorder %s20, 0
      %p145 = por %p143, %p144
      %s146 = ssub.s32 %s21, %s33
      %s147 = ssub.s32 %s22, %s29
      %s148 = sor.u32 %s146, %s147
      %p149 = scmp.eq.s32.totalorder %s148, 0
      %s151 = sadd.s32 %s150, 1
      %s152 = scalar_select %p149, %s150, %s151
      %p155 = pneg %p149
      %p156 = scmp.eq.s32.totalorder %s14, 1
      %p157 = por %p155, %p156
      %p158 = scmp.ne.s32.totalorder %s150, %s153
      %p159 = scmp.eq.s32.totalorder %s14, 0
      %p160 = por %p158, %p159
      %p161 = scmp.ne.s32.totalorder %s150, %s153
      %p162 = scmp.eq.s32.totalorder %s19, 1
      %p163 = por %p161, %p162
      %p164 = scmp.ne.s32.totalorder %s153, %s154
      %p165 = scmp.eq.s32.totalorder %s19, 0
      %p166 = por %p164, %p165
      %p167 = scmp.ne.s32.totalorder %s153, %s154
      %p168 = scmp.eq.s32.totalorder %s20, 1
      %p169 = por %p167, %p168
      %p171 = scmp.ne.s32.totalorder %s154, %s170
      %p172 = scmp.eq.s32.totalorder %s20, 0
      %p173 = por %p171, %p172
      %p174 = scmp.le.s32.totalorder 1, %s14
      %p175 = scmp.lt.s32.totalorder %s14, 3
      %p176 = pnand %p174, %p175
      %p177 = pneg %p176
      // Predicated region
      $region9: #{tpu_custom_call.1} parent=5 // pred_check
        _
      $region10: #{tpu_custom_call.1} parent=5 // pred_check_branch
        %179 = sbr.rel (%p176) target = $region12
      $region11: #{tpu_custom_call.1} parent=5 // pred_region
        %s180 = ssub.s32 %s14, 1
        // Predicated region
        $region13: #{tpu_custom_call.1} parent=11 // pred_check
          %p181 = pneg %p75
        $region14: #{tpu_custom_call.1} parent=11 // pred_check_branch
          %183 = sbr.rel (%p181) target = $region16
        $region15: #{tpu_custom_call.1} parent=11 // pred_region
          _
        $region16: #{tpu_custom_call.1} parent=11 // pred_fallthru
          _
        // Predicated region
        $region17: #{tpu_custom_call.1} parent=11 // pred_check
          %p184 = pneg %p96
        $region18: #{tpu_custom_call.1} parent=11 // pred_check_branch
          %186 = sbr.rel (%p184) target = $region20
        $region19: #{tpu_custom_call.1} parent=11 // pred_region
          _
        $region20: #{tpu_custom_call.1} parent=11 // pred_fallthru
          _
        // Predicated region
        $region21: #{tpu_custom_call.1} parent=11 // pred_check
          %p187 = pneg %p117
        $region22: #{tpu_custom_call.1} parent=11 // pred_check_branch
          %189 = sbr.rel (%p187) target = $region24
        $region23: #{tpu_custom_call.1} parent=11 // pred_region
          _
        $region24: #{tpu_custom_call.1} parent=11 // pred_fallthru
          _
        // Predicated region
        $region25: #{tpu_custom_call.1} parent=11 // pred_check
          %p190 = pneg %p138
        $region26: #{tpu_custom_call.1} parent=11 // pred_check_branch
          %192 = sbr.rel (%p190) target = $region28
        $region27: #{tpu_custom_call.1} parent=11 // pred_region
          _
        $region28: #{tpu_custom_call.1} parent=11 // pred_fallthru
          _
      $region12: #{tpu_custom_call.1} parent=5 // pred_fallthru
        _
      %p193 = scmp.lt.s32.totalorder %s14, 2
      // Predicated region
      $region29: #{tpu_custom_call.1} parent=5 // pred_check
        %p194 = pneg %p193
      $region30: #{tpu_custom_call.1} parent=5 // pred_check_branch
        %196 = sbr.rel (%p194) target = $region32
      $region31: #{tpu_custom_call.1} parent=5 // pred_region
        // Predicated region
        $region33: #{tpu_custom_call.1} parent=31 // pred_check
          %p197 = pneg %p48
        $region34: #{tpu_custom_call.1} parent=31 // pred_check_branch
          %199 = sbr.rel (%p197) target = $region36
        $region35: #{tpu_custom_call.1} parent=31 // pred_region
          %p200 = scmp.lt.s32.totalorder %s21, 1
          %s201 = scalar_select %p200, %s21, 1
          %p202 = scmp.lt.s32.totalorder %s22, 0
          %s203 = scalar_select %p202, %s22, 0
          %s204 = sadd.s32 %s203, %s201
          %s205 = smul.addr %s204, 8
          %s206 = scalar_lea.vmem %s0, %s205
        $region36: #{tpu_custom_call.1} parent=31 // pred_fallthru
          _
      $region32: #{tpu_custom_call.1} parent=5 // pred_fallthru
        _
      %p207 = scmp.le.s32.totalorder 1, %s14
      %p208 = scmp.lt.s32.totalorder %s14, 3
      %p209 = pnand %p207, %p208
      %p210 = pneg %p209
      // Predicated region
      $region37: #{tpu_custom_call.1} parent=5 // pred_check
        _
      $region38: #{tpu_custom_call.1} parent=5 // pred_check_branch
        %212 = sbr.rel (%p209) target = $region40
      $region39: #{tpu_custom_call.1} parent=5 // pred_region
        %s213 = ssub.s32 %s14, 1
        %p214 = scmp.lt.s32.totalorder %s23, 1
        %s215 = scalar_select %p214, %s23, 1
        %p216 = scmp.lt.s32.totalorder %s24, 0
        %s217 = scalar_select %p216, %s24, 0
        %s218 = sadd.s32 %s217, %s215
        %s219 = smul.addr %s218, 8
        %s220 = scalar_lea.vmem %s0, %s219
        %p221 = pneg %p54
        %p222 = pneg %p51
        %p223 = pneg %p75
        %p224 = pneg %p72
        %p225 = pneg %p96
        %p226 = pneg %p93
        %p227 = pneg %p117
        %p228 = pneg %p114
        %p229 = pneg %p138
        %p230 = pneg %p135
        %p231 = pneg %p166
        %p232 = pneg %p163
        %s233 = sand.u32 %s153, 1
        %s234 = scalar_lea.sflag [#allocation4], %s233
        %s235 = sand.u32 %s153, 1
        %s236 = smul.addr %s235, 8
        %s237 = scalar_lea.vmem [#allocation3], %s236
        %p238 = scmp.lt.s32.totalorder %s23, 1
        %s239 = scalar_select %p238, %s23, 1
        %p240 = scmp.lt.s32.totalorder %s24, 0
        %s241 = scalar_select %p240, %s24, 0
        %s242 = sadd.s32 %s241, %s239
        %s243 = smul.addr %s242, 8
        %s244 = scalar_lea.vmem %s0, %s243
        %v245 = vld [vmem:[%s244] sm:$0xff]
        %p246 = scmp.eq.s32.totalorder %s24, 0
        // Predicated region
        $region41: #{tpu_custom_call.1} parent=39 // pred_check
          %p247 = pneg %p246
        $region42: #{tpu_custom_call.1} parent=39 // pred_check_branch
          %249 = sbr.rel (%p247) target = $region44
        $region43: #{tpu_custom_call.1} parent=39 // pred_region
          %vm250 = vcmask 15360
          %251 = vst.msk [vmem:[#allocation2] sm:$0xff] %vm250, 0.0
        $region44: #{tpu_custom_call.1} parent=39 // pred_fallthru
          _
        %v252 = vld [vmem:[#allocation2] sm:$0xff]
        %254 = vrot.lane.b32.xlu0 %v245, 2
        %v255 = vpop.permute.xlu0 %254
        %vm257 = vcmask 15360
        %v258 = vsel %vm257, %v252, %v255
        %259 = vrot.lane.b32.xlu0 %v245, 114
        %v260 = vpop.permute.xlu0 %259
        %262 = vst.msk [vmem:[#allocation2] sm:$0xff] %vm257, %v260
        %264 = vrot.lane.b32.xlu0 %v258, 127
        %v265 = vpop.permute.xlu0 %264
        %267 = vrot.lane.b32.xlu0 %v258, 126
        %v268 = vpop.permute.xlu0 %267
        %v270 = vld [vmem:[%s1] sm:$0xff]
        %v271 = vld [vmem:[%s1 + $0x8] sm:$0xff]
        %v272 = vld [vmem:[%s1 + $0x10] sm:$0xff]
        %v273 = vld [vmem:[%s1 + $0x18] sm:$0xff]
        %v274 = vld [vmem:[%s2] sm:$0xff]
        %v275 = vld [vmem:[%s2 + $0x8] sm:$0xff]
        %v276 = vld [vmem:[%s2 + $0x10] sm:$0xff]
        %v277 = vld [vmem:[%s2 + $0x18] sm:$0xff]
        %279 = vset.pattern.permute.xlu0 0
        %280 = vperm.xlu0 %279, %v274
        %v281 = vpop.permute.xlu0 %280
        %284 = vset.pattern.permute.xlu0 0
        %285 = vperm.xlu0 %284, %v275
        %v286 = vpop.permute.xlu0 %285
        %289 = vset.pattern.permute.xlu0 0
        %290 = vperm.xlu0 %289, %v276
        %v291 = vpop.permute.xlu0 %290
        %294 = vset.pattern.permute.xlu0 0
        %295 = vperm.xlu0 %294, %v277
        %v296 = vpop.permute.xlu0 %295
        %vm298 = vcmask 195584
        %v300 = vsel %vm298, %v270, 0
        %v303 = vsel %vm298, %v271, 0
        %v306 = vsel %vm298, %v272, 0
        %v309 = vsel %vm298, %v273, 0
        %311 = vmatprep.subr.mxu0 0.0
        %312 = vmatpush1.msra.mxu0 %v258
        %313 = vmatprep.subr.mxu0 0.0
        %314 = vmatpush1.msra.mxu0 %v265
        %315 = vmatprep.subr.mxu0 0.0
        %316 = vmatpush1.msra.mxu0 %v268
        %317 = vmatprep.subr.mxu0 0.0
        %318 = vmatpush1.msra.mxu0 0.0
        %319 = vmatprep.subr.mxu0 0.0
        %320 = vmatpush1.msra.mxu0 0.0
        %321 = vmatprep.subr.mxu0 0.0
        %322 = vmatpush1.msra.mxu0 0.0
        %323 = vmatprep.subr.mxu0 0.0
        %324 = vmatpush1.msra.mxu0 0.0
        %325 = vmatprep.subr.mxu0 0.0
        %326 = vmatpush1.msra.mxu0 0.0
        %327 = vmatprep.subr.mxu0 0.0
        %328 = vmatpush1.msra.mxu0 0.0
        %329 = vmatprep.subr.mxu0 0.0
        %330 = vmatpush1.msra.mxu0 0.0
        %331 = vmatprep.subr.mxu0 0.0
        %332 = vmatpush1.msra.mxu0 0.0
        %333 = vmatprep.subr.mxu0 0.0
        %334 = vmatpush1.msra.mxu0 0.0
        %335 = vmatprep.subr.mxu0 0.0
        %336 = vmatpush1.msra.mxu0 0.0
        %337 = vmatprep.subr.mxu0 0.0
        %338 = vmatpush1.msra.mxu0 0.0
        %339 = vmatprep.subr.mxu0 0.0
        %340 = vmatpush1.msra.mxu0 0.0
        %341 = vmatprep.subr.mxu0 0.0
        %342 = vmatpush1.msra.mxu0 0.0
        %343 = vmatprep.subr.mxu0 0.0
        %344 = vmatpush1.msra.mxu0 0.0
        %345 = vmatprep.subr.mxu0 0.0
        %346 = vmatpush1.msra.mxu0 0.0
        %347 = vmatprep.subr.mxu0 0.0
        %348 = vmatpush1.msra.mxu0 0.0
        %349 = vmatprep.subr.mxu0 0.0
        %350 = vmatpush1.msra.mxu0 0.0
        %351 = vmatprep.subr.mxu0 0.0
        %352 = vmatpush1.msra.mxu0 0.0
        %353 = vmatprep.subr.mxu0 0.0
        %354 = vmatpush1.msra.mxu0 0.0
        %355 = vmatprep.subr.mxu0 0.0
        %356 = vmatpush1.msra.mxu0 0.0
        %357 = vmatprep.subr.mxu0 0.0
        %358 = vmatpush1.msra.mxu0 0.0
        %359 = vmatprep.subr.mxu0 0.0
        %360 = vmatpush1.msra.mxu0 0.0
        %361 = vmatprep.subr.mxu0 0.0
        %362 = vmatpush1.msra.mxu0 0.0
        %363 = vmatprep.subr.mxu0 0.0
        %364 = vmatpush1.msra.mxu0 0.0
        %365 = vmatprep.subr.mxu0 0.0
        %366 = vmatpush1.msra.mxu0 0.0
        %367 = vmatprep.subr.mxu0 0.0
        %368 = vmatpush1.msra.mxu0 0.0
        %369 = vmatprep.subr.mxu0 0.0
        %370 = vmatpush1.msra.mxu0 0.0
        %371 = vmatprep.subr.mxu0 0.0
        %372 = vmatpush1.msra.mxu0 0.0
        %373 = vmatprep.subr.mxu0 0.0
        %374 = vmatpush1.msra.mxu0 0.0
        %375 = vmatprep.mubr.f32.mxu0 0.0
        %376 = vmatmul.mubr.f32.gmra.mrb[0].mxu0 %v300
        %v377 = vpop.f32.mrb[0].mxu0
        %v378 = vadd.f32 %v281, %v377
        %v379 = vpop.f32.mrb[0].mxu0
        %380 = vmatprep.mubr.f32.mxu0 0.0
        %381 = vmatmul.mubr.f32.gmra.mrb[0].mxu0 %v303
        %v382 = vpop.f32.mrb[0].mxu0
        %v383 = vadd.f32 %v286, %v382
        %v384 = vpop.f32.mrb[0].mxu0
        %385 = vmatprep.mubr.f32.mxu0 0.0
        %386 = vmatmul.mubr.f32.gmra.mrb[0].mxu0 %v306
        %v387 = vpop.f32.mrb[0].mxu0
        %v388 = vadd.f32 %v291, %v387
        %v389 = vpop.f32.mrb[0].mxu0
        %390 = vmatprep.mubr.f32.mxu0 0.0
        %391 = vmatmul.mubr.f32.gmra.mrb[0].mxu0 %v309
        %v392 = vpop.f32.mrb[0].mxu0
        %v393 = vadd.f32 %v296, %v392
        %v394 = vpop.f32.mrb[0].mxu0
        %395 = vdwg.mxu0
        %v396 = vmax.f32 %v378, 0.0
        %v397 = vmax.f32 %v383, 0.0
        %v398 = vxor.u32 %v388, 2147483648
        %v399 = vxor.u32 %v393, 2147483648
        %v400 = vmul.f32 %v398, 1.442695
        %v401 = vpow.pop %v400
        %v402 = vmul.f32 %v399, 1.442695
        %v403 = vpow.pop %v402
        %v404 = vadd.f32 %v401, 1.0
        %v405 = vadd.f32 %v403, 1.0
        %v406 = vrcp.pop %v404
        %v407 = vmul.f32 1.0, %v406
        %v408 = vrcp.pop %v405
        %v409 = vmul.f32 1.0, %v408
        %v410 = vmul.f32 %v396, %v407
        %v411 = vmul.f32 %v397, %v409
        %v412 = vld [vmem:[%s3] sm:$0xff]
        %v413 = vld [vmem:[%s4] sm:$0xff]
        %415 = vset.pattern.permute.xlu0 0
        %416 = vperm.xlu0 %415, %v413
        %v417 = vpop.permute.xlu0 %416
        %vm419 = vcmask 130048
        %v421 = vsel %vm419, %v412, 0
        %423 = vmatprep.subr.mxu0 0.0
        %424 = vmatpush1.msra.mxu0 %v410
        %425 = vmatprep.subr.mxu0 0.0
        %426 = vmatpush1.msra.mxu0 %v411
        %427 = vmatprep.subr.mxu0 0.0
        %428 = vmatpush1.msra.mxu0 0.0
        %429 = vmatprep.subr.mxu0 0.0
        %430 = vmatpush1.msra.mxu0 0.0
        %431 = vmatprep.subr.mxu0 0.0
        %432 = vmatpush1.msra.mxu0 0.0
        %433 = vmatprep.subr.mxu0 0.0
        %434 = vmatpush1.msra.mxu0 0.0
        %435 = vmatprep.subr.mxu0 0.0
        %436 = vmatpush1.msra.mxu0 0.0
        %437 = vmatprep.subr.mxu0 0.0
        %438 = vmatpush1.msra.mxu0 0.0
        %439 = vmatprep.subr.mxu0 0.0
        %440 = vmatpush1.msra.mxu0 0.0
        %441 = vmatprep.subr.mxu0 0.0
        %442 = vmatpush1.msra.mxu0 0.0
        %443 = vmatprep.subr.mxu0 0.0
        %444 = vmatpush1.msra.mxu0 0.0
        %445 = vmatprep.subr.mxu0 0.0
        %446 = vmatpush1.msra.mxu0 0.0
        %447 = vmatprep.subr.mxu0 0.0
        %448 = vmatpush1.msra.mxu0 0.0
        %449 = vmatprep.subr.mxu0 0.0
        %450 = vmatpush1.msra.mxu0 0.0
        %451 = vmatprep.subr.mxu0 0.0
        %452 = vmatpush1.msra.mxu0 0.0
        %453 = vmatprep.subr.mxu0 0.0
        %454 = vmatpush1.msra.mxu0 0.0
        %455 = vmatprep.subr.mxu0 0.0
        %456 = vmatpush1.msra.mxu0 0.0
        %457 = vmatprep.subr.mxu0 0.0
        %458 = vmatpush1.msra.mxu0 0.0
        %459 = vmatprep.subr.mxu0 0.0
        %460 = vmatpush1.msra.mxu0 0.0
        %461 = vmatprep.subr.mxu0 0.0
        %462 = vmatpush1.msra.mxu0 0.0
        %463 = vmatprep.subr.mxu0 0.0
        %464 = vmatpush1.msra.mxu0 0.0
        %465 = vmatprep.subr.mxu0 0.0
        %466 = vmatpush1.msra.mxu0 0.0
        %467 = vmatprep.subr.mxu0 0.0
        %468 = vmatpush1.msra.mxu0 0.0
        %469 = vmatprep.subr.mxu0 0.0
        %470 = vmatpush1.msra.mxu0 0.0
        %471 = vmatprep.subr.mxu0 0.0
        %472 = vmatpush1.msra.mxu0 0.0
        %473 = vmatprep.subr.mxu0 0.0
        %474 = vmatpush1.msra.mxu0 0.0
        %475 = vmatprep.subr.mxu0 0.0
        %476 = vmatpush1.msra.mxu0 0.0
        %477 = vmatprep.subr.mxu0 0.0
        %478 = vmatpush1.msra.mxu0 0.0
        %479 = vmatprep.subr.mxu0 0.0
        %480 = vmatpush1.msra.mxu0 0.0
        %481 = vmatprep.subr.mxu0 0.0
        %482 = vmatpush1.msra.mxu0 0.0
        %483 = vmatprep.subr.mxu0 0.0
        %484 = vmatpush1.msra.mxu0 0.0
        %485 = vmatprep.subr.mxu0 0.0
        %486 = vmatpush1.msra.mxu0 0.0
        %487 = vmatprep.mubr.f32.mxu0 0.0
        %488 = vmatmul.mubr.f32.gmra.mrb[0].mxu0 %v421
        %v489 = vpop.f32.mrb[0].mxu0
        %v490 = vadd.f32 %v417, %v489
        %v491 = vpop.f32.mrb[0].mxu0
        %492 = vdwg.mxu0
        %v493 = vadd.f32 %v245, %v490
        %494 = vst.msk [vmem:[%s237] sm:$0xff] %vm419, %v493
        %s495 = sand.u32 %s153, 1
        %s496 = scalar_lea.sflag [#allocation4], %s495
        %s497 = sand.u32 %s153, 1
        %s498 = smul.addr %s497, 8
        %s499 = scalar_lea.vmem [#allocation3], %s498
        // Predicated region
        $region45: #{tpu_custom_call.1} parent=39 // pred_check
          %p500 = pneg %p163
        $region46: #{tpu_custom_call.1} parent=39 // pred_check_branch
          %502 = sbr.rel (%p500) target = $region48
        $region47: #{tpu_custom_call.1} parent=39 // pred_region
          %s504 = ssub.s32 128, 128
          %505 = vsyncadd %s496, %s504
          %s506 = sadd.s32 %s24, %s23
          %s507 = smul.addr %s506, 128
          %s508 = scalar_lea.hbm %s5, %s507
          %s510 = sshll.u32 %s499, 4
          %s511 = int_to_ptr.vmem [resolvable:$true] %s510
          %513 = dma.vmem_to_hbm [thread:$0]  %s511, 128, %s508, %s496
        $region48: #{tpu_custom_call.1} parent=39 // pred_fallthru
          _
      $region40: #{tpu_custom_call.1} parent=5 // pred_fallthru
        _
      %p514 = scmp.le.s32.totalorder 2, %s14
      // Predicated region
      $region49: #{tpu_custom_call.1} parent=5 // pred_check
        %p515 = pneg %p514
      $region50: #{tpu_custom_call.1} parent=5 // pred_check_branch
        %517 = sbr.rel (%p515) target = $region52
      $region51: #{tpu_custom_call.1} parent=5 // pred_region
        %s518 = ssub.s32 %s14, 2
        // Predicated region
        $region53: #{tpu_custom_call.1} parent=51 // pred_check
          %p519 = pneg %p169
        $region54: #{tpu_custom_call.1} parent=51 // pred_check_branch
          %521 = sbr.rel (%p519) target = $region56
        $region55: #{tpu_custom_call.1} parent=51 // pred_region
          %s522 = sand.u32 %s154, 1
          %s523 = scalar_lea.sflag [#allocation4], %s522
          %s524 = sand.u32 %s154, 1
          %s525 = smul.addr %s524, 8
          %s526 = scalar_lea.vmem [#allocation3], %s525
          %527 = dma.done %s523, 128
        $region56: #{tpu_custom_call.1} parent=51 // pred_fallthru
          _
      $region52: #{tpu_custom_call.1} parent=5 // pred_fallthru
        _
    $region6: #{tpu_custom_call.1} parent=1 // loop_footer
      %s18 = sadd.s32 1, %s14
    $region7: #{tpu_custom_call.1} parent=1 // loop_footer_branch
      %13 = sbr.rel target = $region3
    $region8: #{tpu_custom_call.1} parent=1 // loop_exit
      _
    %528 = vsyncpa [#allocation4], 1
    %s529 = scalar_lea.sflag [#allocation4], 1
    %530 = vsyncpa %s529, 1

</llo_original>
